<compile_context>
chip_gen: v5e
topology: v5e:2x2
jax: 0.10.0
libtpu: 0.0.40
codegen_flags: <defaults>
</compile_context>

<pallas_src>
import jax
import jax.numpy as jnp
from jax.experimental import pallas as pl
from jax.experimental.pallas import tpu as pltpu


def _round_up(x, m):
    return ((x + m - 1) // m) * m


def _cdiv(a, b):
    return (a + b - 1) // b


def _pfg_linear_kernel(x_ref, w_ref, b_ref, o_ref):
    """Single-shot tile: o = x_tile @ w_tile + b_tile (full-K reduction, f32 acc)."""
    acc = jnp.dot(x_ref[...], w_ref[...], preferred_element_type=jnp.float32)
    o_ref[...] = (acc + b_ref[...].astype(jnp.float32)).astype(o_ref.dtype)


def _pfg_linear_padded(x_pad, w_pad, b2d, *, tm, tn, x_resident, out_dtype):
    """x_pad: (m_pad, k_pad), w_pad: (k_pad, n_pad), b2d: (1, n_pad) -> (m_pad, n_pad)."""
    m_pad, k_pad = x_pad.shape
    _, n_pad = w_pad.shape
    tiles_m = m_pad // tm
    tiles_n = n_pad // tn

    xb = jnp.dtype(x_pad.dtype).itemsize
    wb = jnp.dtype(w_pad.dtype).itemsize
    footprint = 2 * (tm * k_pad * xb + k_pad * tn * wb + tm * tn * 4)
    vmem_limit = int(min(48 * 1024 * 1024, max(32 * 1024 * 1024, footprint + (4 << 20))))

    cost = pl.CostEstimate(
        flops=2 * m_pad * k_pad * n_pad,
        transcendentals=0,
        bytes_accessed=(m_pad * k_pad * xb + k_pad * n_pad * wb + m_pad * n_pad * 4),
    )

    if x_resident:
        # x block constant across inner N loop (x read from HBM once).
        grid = (tiles_m, tiles_n)
        in_specs = [
            pl.BlockSpec((tm, k_pad), lambda i, j: (i, 0)),
            pl.BlockSpec((k_pad, tn), lambda i, j: (0, j)),
            pl.BlockSpec((1, tn), lambda i, j: (0, j)),
        ]
        out_spec = pl.BlockSpec((tm, tn), lambda i, j: (i, j))
    else:
        # W column block constant across inner M loop (W read from HBM once).
        grid = (tiles_n, tiles_m)
        in_specs = [
            pl.BlockSpec((tm, k_pad), lambda j, i: (i, 0)),
            pl.BlockSpec((k_pad, tn), lambda j, i: (0, j)),
            pl.BlockSpec((1, tn), lambda j, i: (0, j)),
        ]
        out_spec = pl.BlockSpec((tm, tn), lambda j, i: (i, j))

    return pl.pallas_call(
        _pfg_linear_kernel,
        out_shape=jax.ShapeDtypeStruct((m_pad, n_pad), out_dtype),
        grid=grid,
        in_specs=in_specs,
        out_specs=out_spec,
        compiler_params=pltpu.CompilerParams(
            dimension_semantics=("parallel", "parallel"),
            vmem_limit_bytes=vmem_limit,
        ),
        cost_estimate=cost,
    )(x_pad, w_pad, b2d)


class PFGNetworkPallas:
    """JAX/Pallas port of PFGNetwork (Linear + reshape).

    Weight stored as (D_in, D_out) = transpose of torch Linear's (D_out, D_in),
    padded once at init to (k_pad, n_pad) so the forward pass touches it only
    through the kernel's BlockSpec DMA.
    """

    def __init__(self, input_size=768, cross_attention_dim=1024, num_tokens=1,
                 key=jax.random.PRNGKey(0), param_dtype=jnp.float32):
        self.input_size = input_size
        self.cross_attention_dim = cross_attention_dim
        self.num_tokens = num_tokens
        self.param_dtype = param_dtype
        out_features = cross_attention_dim * num_tokens
        self.out_features = out_features

        kw, kb = jax.random.split(key)
        bound = 1.0 / (input_size ** 0.5)  # torch Linear U(-1/sqrt(fan_in), 1/sqrt(fan_in))
        w = jax.random.uniform(kw, (input_size, out_features), jnp.float32,
                               minval=-bound, maxval=bound)
        b = jax.random.uniform(kb, (out_features,), jnp.float32,
                               minval=-bound, maxval=bound)
        self.w = w  # unpadded f32 master copy (reference / save_weights analogue)
        self.b = b

        # ---- one-time padding / layout prep -------------------------------
        k_pad = _round_up(input_size, 128)
        # Choose tn first: up to 512, multiple of 128, double-buffered W block
        # kept well under VMEM budget even for large K.
        tn = min(512, _round_up(out_features, 128))
        wbytes = jnp.dtype(param_dtype).itemsize
        while tn > 128 and 2 * k_pad * tn * wbytes > 24 * 1024 * 1024:
            tn = max(128, _round_up(tn // 2, 128))
        n_pad = _round_up(out_features, tn)

        w_pad = jnp.pad(w, ((0, k_pad - input_size), (0, n_pad - out_features)))
        b_pad = jnp.pad(b, (0, n_pad - out_features))
        self.w_pad = w_pad.astype(param_dtype)
        self.b2d = b_pad.reshape(1, n_pad).astype(jnp.float32)
        self.k_pad = k_pad
        self.n_pad = n_pad
        self.tn = tn

        self._forward = jax.jit(self._forward_impl)

    # ------------------------------------------------------------------ #
    def _forward_impl(self, x):
        x2d = x.reshape(-1, self.input_size)
        out_dtype = x2d.dtype
        M = x2d.shape[0]
        k_pad, n_pad, tn = self.k_pad, self.n_pad, self.tn

        # Row tile: up to 512 rows, multiple of 8, chosen to minimize pad waste.
        tm = _round_up(_cdiv(M, _cdiv(M, 512)), 8)
        tm = max(8, min(tm, _round_up(M, 8)))

        # VMEM-footprint guard (double-buffered x + W + out tiles <= ~40 MiB).
        cbytes = jnp.dtype(self.param_dtype).itemsize
        wbytes = jnp.dtype(self.param_dtype).itemsize

        def _fp(tm_):
            return 2 * (tm_ * k_pad * cbytes + k_pad * tn * wbytes + tm_ * tn * 4)

        while tm > 8 and _fp(tm) > 40 * 1024 * 1024:
            tm = max(8, _round_up(tm // 2, 8))

        m_pad = _round_up(M, tm)
        tiles_m = m_pad // tm
        tiles_n = n_pad // tn

        # Residency: keep the larger operand on the outer (constant) axis.
        x_resident = (m_pad * k_pad) > (k_pad * n_pad)
        # v7x: make sure the outer 'parallel' axis has >=2 tiles when possible.
        outer_tiles = tiles_m if x_resident else tiles_n
        inner_tiles = tiles_n if x_resident else tiles_m
        if outer_tiles == 1 and inner_tiles >= 2:
            x_resident = not x_resident

        # Pad x (cheap: x is small relative to W at PFG shapes) and cast to the
        # compute/param dtype so bf16 weights hit the native bf16 MXU path.
        x_pad = jnp.pad(x2d, ((0, m_pad - M), (0, k_pad - self.input_size)))
        x_pad = x_pad.astype(self.param_dtype)

        out = _pfg_linear_padded(
            x_pad, self.w_pad, self.b2d,
            tm=tm, tn=tn, x_resident=x_resident, out_dtype=out_dtype,
        )
        out = out[:M, :self.out_features]
        return out.reshape(-1, self.num_tokens, self.cross_attention_dim)

    def __call__(self, x):
        return self._forward(x)


if __name__ == "__main__":
    # Small shapes consistent with the module (scaled down from 768/1024),
    # exercising aligned, ragged-batch and x-resident paths.
    input_size = 128
    cross_attention_dim = 256
    num_tokens = 1

    key = jax.random.PRNGKey(0)
    k_param, k_x1, k_x2, k_x3 = jax.random.split(key, 4)

    # --- f32 network: exact check -------------------------------------------
    net = PFGNetworkPallas(
        input_size=input_size,
        cross_attention_dim=cross_attention_dim,
        num_tokens=num_tokens,
        key=k_param,
        param_dtype=jnp.float32,
    )

    # Case 1: aligned batch
    batch = 8
    x = jax.random.normal(k_x1, (batch, input_size), dtype=jnp.float32)
    out = jax.block_until_ready(net(x))
    ref = (x @ net.w + net.b).reshape(-1, num_tokens, cross_attention_dim)
    assert out.shape == (batch, num_tokens, cross_attention_dim), out.shape
    assert jnp.allclose(out, ref, atol=1e-5, rtol=1e-5)

    # Case 2: ragged batch (not a multiple of 8) -> padding path
    batch2 = 6
    x2 = jax.random.normal(k_x2, (batch2, input_size), dtype=jnp.float32)
    out2 = jax.block_until_ready(net(x2))
    ref2 = (x2 @ net.w + net.b).reshape(-1, num_tokens, cross_attention_dim)
    assert out2.shape == (batch2, num_tokens, cross_attention_dim), out2.shape
    assert jnp.allclose(out2, ref2, atol=1e-5, rtol=1e-5)

    # Case 3: large-ish ragged batch -> x-resident grid ordering path
    batch3 = 300
    x3 = jax.random.normal(k_x3, (batch3, input_size), dtype=jnp.float32)
    out3 = jax.block_until_ready(net(x3))
    ref3 = (x3 @ net.w + net.b).reshape(-1, num_tokens, cross_attention_dim)
    assert out3.shape == (batch3, num_tokens, cross_attention_dim), out3.shape
    assert jnp.allclose(out3, ref3, atol=1e-5, rtol=1e-5)

    # --- bf16-weight network: tolerance-gated perf path ----------------------
    net_bf16 = PFGNetworkPallas(
        input_size=input_size,
        cross_attention_dim=cross_attention_dim,
        num_tokens=num_tokens,
        key=k_param,
        param_dtype=jnp.bfloat16,
    )
    out_bf = jax.block_until_ready(net_bf16(x))
    ref_bf = (x @ net_bf16.w + net_bf16.b).reshape(-1, num_tokens, cross_attention_dim)
    assert out_bf.shape == (batch, num_tokens, cross_attention_dim), out_bf.shape
    assert jnp.allclose(out_bf.astype(jnp.float32), ref_bf, atol=5e-2, rtol=5e-2)

    print("KERNEL_OK")
</pallas_src>

<mosaic_0001>
module attributes {stable_mosaic.version = 11 : i64} {
  func.func @_pfg_linear_kernel(%arg0: i32, %arg1: i32, %arg2: memref<8x128xf32, #tpu.memory_space<vmem>>, %arg3: memref<128x256xf32, #tpu.memory_space<vmem>>, %arg4: memref<1x256xf32, #tpu.memory_space<vmem>>, %arg5: memref<8x256xf32, #tpu.memory_space<vmem>>) attributes {dimension_semantics = [#tpu.dimension_semantics<parallel>, #tpu.dimension_semantics<parallel>], iteration_bounds = array<i64: 1, 1>, scalar_prefetch = 0 : i64, scratch_operands = 0 : i64, tpu.core_type = #tpu.core_type<tc>, window_params = [{transform_indices = @transform_0, window_bounds = array<i64: 8, 128>}, {transform_indices = @transform_1, window_bounds = array<i64: 128, 256>}, {transform_indices = @transform_2, window_bounds = array<i64: 1, 256>}, {transform_indices = @transform_3, window_bounds = array<i64: 8, 256>}]} {
    %c0 = arith.constant 0 : index
    %c0_0 = arith.constant 0 : index
    %0 = vector.load %arg2[%c0, %c0_0] : memref<8x128xf32, #tpu.memory_space<vmem>>, vector<8x128xf32>
    %c0_1 = arith.constant 0 : index
    %c0_2 = arith.constant 0 : index
    %1 = vector.load %arg3[%c0_1, %c0_2] : memref<128x256xf32, #tpu.memory_space<vmem>>, vector<128x256xf32>
    %cst = arith.constant dense<0.000000e+00> : vector<8x256xf32>
    %2 = tpu.matmul %0, %1, %cst {dimension_numbers = #tpu.dot_dimension_numbers<[1], [0], [0], [1], [0, 0, 1, 1], [], []>} : vector<8x128xf32>, vector<128x256xf32>, vector<8x256xf32> -> vector<8x256xf32>
    %c0_3 = arith.constant 0 : index
    %c0_4 = arith.constant 0 : index
    %3 = vector.load %arg4[%c0_3, %c0_4] : memref<1x256xf32, #tpu.memory_space<vmem>>, vector<1x256xf32>
    %4 = vector.broadcast %3 : vector<1x256xf32> to vector<8x256xf32>
    %5 = arith.addf %2, %4 : vector<8x256xf32>
    %c0_5 = arith.constant 0 : index
    %c0_6 = arith.constant 0 : index
    %6 = vector.load %arg5[%c0_5, %c0_6] : memref<8x256xf32, #tpu.memory_space<vmem>>, vector<8x256xf32>
    tpu.vector_store %arg5[%c0_5, %c0_6], %5 {strides = array<i32>} : memref<8x256xf32, #tpu.memory_space<vmem>>, vector<8x256xf32>,
    return
  }
  func.func @transform_0(%arg0: i32, %arg1: i32) -> (i32, i32) {
    %c0_i32 = arith.constant 0 : i32
    %c0_i32_0 = arith.constant 0 : i32
    return %arg1, %c0_i32 : i32, i32
  }
  func.func @transform_1(%arg0: i32, %arg1: i32) -> (i32, i32) {
    %c0_i32 = arith.constant 0 : i32
    %c0_i32_0 = arith.constant 0 : i32
    return %c0_i32, %arg0 : i32, i32
  }
  func.func @transform_2(%arg0: i32, %arg1: i32) -> (i32, i32) {
    %c0_i32 = arith.constant 0 : i32
    %c0_i32_0 = arith.constant 0 : i32
    return %c0_i32, %arg0 : i32, i32
  }
  func.func @transform_3(%arg0: i32, %arg1: i32) -> (i32, i32) {
    %c0_i32 = arith.constant 0 : i32
    return %arg1, %arg0 : i32, i32
  }
}

</mosaic_0001>

<llo_original>
// kernel: _forward_impl.1
$region0: #{_forward_impl.1}
  #allocation0 [shape = 'u32[]', space=smem, size = 0x4, offset = 0x4, fixed_abs, tag = 'smem constant byte address 0x4 - core index']
  #allocation1 [shape = 'u32[72,128]{1,0:T(1,128)}', space=vmem, size = 0x9000, scoped, tag = 'internal scratch']
  %s0 = inlined_call_operand.hbm [shape: f32[8,128], index: 0, kind: input, shape index: {}]
  %s1 = inlined_call_operand.hbm [shape: f32[128,256], index: 1, kind: input, shape index: {}]
  %s2 = inlined_call_operand.hbm [shape: f32[1,256], index: 2, kind: input, shape index: {}]
  %s3 = inlined_call_operand.vmem [shape: f32[8,256], index: 3, kind: output, shape index: {}]
  %s4 = sld [smem:[#allocation0]]
  $region34: #{_forward_impl.1} parent=0
    _
  %s6 = ssub.s32 1, %s4
  %s7 = scalar_select 0, %s6, %s4
  $region1: #{_forward_impl.1} parent=0
    #allocation2 [shape = 'u8[4096]{0}', space=vmem, size = 0x1000, scoped, tag = 'input window, operand 0, single buffered']
    #allocation3 [shape = 's32[1]{0}', space=sflag, size = 0x4, scoped, tag = 'scoped memory for _forward_impl.1']
    #allocation4 [shape = 'u8[131072]{0}', space=vmem, size = 0x20000, scoped, tag = 'input window, operand 1, single buffered']
    #allocation5 [shape = 's32[1]{0}', space=sflag, size = 0x4, scoped, tag = 'scoped memory for _forward_impl.1']
    #allocation6 [shape = 'u8[1024]{0}', space=vmem, size = 0x400, scoped, tag = 'input window, operand 2, single buffered']
    %8 = vsyncpa [#allocation3], 0
    %9 = vsyncpa [#allocation5], 0
    // Predicated region
    $region2: #{_forward_impl.1} parent=1 // pred_check
      _
    $region3: #{_forward_impl.1} parent=1 // pred_check_branch
      %11 = sbr.rel (0) target = $region5
    $region4: #{_forward_impl.1} parent=1 // pred_region
      %13 = vsyncadd [#allocation3], 0
      %s15 = sshll.u32 %s0, 4
      %s16 = int_to_ptr.hbm [resolvable:$true] %s15
      %s17 = sshll.u32 [#allocation2], 4
      %s18 = int_to_ptr.vmem [resolvable:$true] %s17
      %20 = dma.hbm_to_vmem [thread:$0]  %s16, 128, %s18, [#allocation3]
    $region5: #{_forward_impl.1} parent=1 // pred_fallthru
      _
    // Predicated region
    $region6: #{_forward_impl.1} parent=1 // pred_check
      _
    $region7: #{_forward_impl.1} parent=1 // pred_check_branch
      %22 = sbr.rel (0) target = $region9
    $region8: #{_forward_impl.1} parent=1 // pred_region
      %24 = vsyncadd [#allocation5], 0
      %s25 = sshll.u32 %s1, 4
      %s26 = int_to_ptr.hbm [resolvable:$true] %s25
      %s27 = sshll.u32 [#allocation4], 4
      %s28 = int_to_ptr.vmem [resolvable:$true] %s27
      %33 = dma.hbm_to_vmem [thread:$0]  %s26, 4096, %s28, [#allocation5], 256, 256, 16
    $region9: #{_forward_impl.1} parent=1 // pred_fallthru
      _
    // Predicated region
    $region10: #{_forward_impl.1} parent=1 // pred_check
      _
    $region11: #{_forward_impl.1} parent=1 // pred_check_branch
      %35 = sbr.rel (0) target = $region13
    $region12: #{_forward_impl.1} parent=1 // pred_region
      %37 = vsyncadd [#allocation5], 0
      %s39 = sshll.u32 %s2, 4
      %s40 = int_to_ptr.hbm [resolvable:$true] %s39
      %s41 = sshll.u32 [#allocation6], 4
      %s42 = int_to_ptr.vmem [resolvable:$true] %s41
      %44 = dma.hbm_to_vmem [thread:$0]  %s40, 32, %s42, [#allocation5]
    $region13: #{_forward_impl.1} parent=1 // pred_fallthru
      _
    // Predicated region
    $region14: #{_forward_impl.1} parent=1 // pred_check
      _
    $region15: #{_forward_impl.1} parent=1 // pred_check_branch
      %46 = sbr.rel (0) target = $region17
    $region16: #{_forward_impl.1} parent=1 // pred_region
      %48 = dma.done [#allocation3], 128
    $region17: #{_forward_impl.1} parent=1 // pred_fallthru
      _
    // Predicated region
    $region18: #{_forward_impl.1} parent=1 // pred_check
      _
    $region19: #{_forward_impl.1} parent=1 // pred_check_branch
      %50 = sbr.rel (0) target = $region21
    $region20: #{_forward_impl.1} parent=1 // pred_region
      %52 = dma.done [#allocation5], 4096
    $region21: #{_forward_impl.1} parent=1 // pred_fallthru
      _
    // Predicated region
    $region22: #{_forward_impl.1} parent=1 // pred_check
      _
    $region23: #{_forward_impl.1} parent=1 // pred_check_branch
      %54 = sbr.rel (0) target = $region25
    $region24: #{_forward_impl.1} parent=1 // pred_region
      %56 = dma.done [#allocation5], 32
    $region25: #{_forward_impl.1} parent=1 // pred_fallthru
      _
    %v57 = vld [vmem:[#allocation2] sm:$0xff]
    %v58 = vld [vmem:[#allocation4] sm:$0xff]
    %v59 = vld [vmem:[#allocation4 + $0x8] sm:$0xff]
    %v60 = vld [vmem:[#allocation4 + $0x10] sm:$0xff]
    %v61 = vld [vmem:[#allocation4 + $0x18] sm:$0xff]
    %v62 = vld [vmem:[#allocation4 + $0x20] sm:$0xff]
    %v63 = vld [vmem:[#allocation4 + $0x28] sm:$0xff]
    %v64 = vld [vmem:[#allocation4 + $0x30] sm:$0xff]
    %v65 = vld [vmem:[#allocation4 + $0x38] sm:$0xff]
    %v66 = vld [vmem:[#allocation4 + $0x40] sm:$0xff]
    %v67 = vld [vmem:[#allocation4 + $0x48] sm:$0xff]
    %v68 = vld [vmem:[#allocation4 + $0x50] sm:$0xff]
    %v69 = vld [vmem:[#allocation4 + $0x58] sm:$0xff]
    %v70 = vld [vmem:[#allocation4 + $0x60] sm:$0xff]
    %v71 = vld [vmem:[#allocation4 + $0x68] sm:$0xff]
    %v72 = vld [vmem:[#allocation4 + $0x70] sm:$0xff]
    %v73 = vld [vmem:[#allocation4 + $0x78] sm:$0xff]
    %v74 = vld [vmem:[#allocation4 + $0x80] sm:$0xff]
    %v75 = vld [vmem:[#allocation4 + $0x88] sm:$0xff]
    %v76 = vld [vmem:[#allocation4 + $0x90] sm:$0xff]
    %v77 = vld [vmem:[#allocation4 + $0x98] sm:$0xff]
    %v78 = vld [vmem:[#allocation4 + $0xa0] sm:$0xff]
    %v79 = vld [vmem:[#allocation4 + $0xa8] sm:$0xff]
    %v80 = vld [vmem:[#allocation4 + $0xb0] sm:$0xff]
    %v81 = vld [vmem:[#allocation4 + $0xb8] sm:$0xff]
    %v82 = vld [vmem:[#allocation4 + $0xc0] sm:$0xff]
    %v83 = vld [vmem:[#allocation4 + $0xc8] sm:$0xff]
    %v84 = vld [vmem:[#allocation4 + $0xd0] sm:$0xff]
    %v85 = vld [vmem:[#allocation4 + $0xd8] sm:$0xff]
    %v86 = vld [vmem:[#allocation4 + $0xe0] sm:$0xff]
    %v87 = vld [vmem:[#allocation4 + $0xe8] sm:$0xff]
    %v88 = vld [vmem:[#allocation4 + $0xf0] sm:$0xff]
    %v89 = vld [vmem:[#allocation4 + $0xf8] sm:$0xff]
    %v90 = vld [vmem:[#allocation6] sm:$0x3]
    %v92 = vperm.slane %v90, 0
    %v93 = vperm.slane %v90, 1
    %96 = vmatpush.msra.mxu0 %v88
    %97 = vmatpush.msra.mxu0 %v86
    %98 = vmatpush.msra.mxu0 %v84
    %99 = vmatpush.msra.mxu0 %v82
    %100 = vmatpush.msra.mxu0 %v80
    %101 = vmatpush.msra.mxu0 %v78
    %102 = vmatpush.msra.mxu0 %v76
    %103 = vmatpush.msra.mxu0 %v74
    %104 = vmatpush.msra.mxu0 %v72
    %105 = vmatpush.msra.mxu0 %v70
    %106 = vmatpush.msra.mxu0 %v68
    %107 = vmatpush.msra.mxu0 %v66
    %108 = vmatpush.msra.mxu0 %v64
    %109 = vmatpush.msra.mxu0 %v62
    %110 = vmatpush.msra.mxu0 %v60
    %111 = vmatpush.msra.mxu0 %v58
    %112 = vmatmul.f32.gmra.mxu0 %v57
    %v113 = vpop.f32.mrf.mxu0
    %v114 = vadd.f32 %v92, %v113
    %115 = vdwg.mxu0
    %116 = vmatpush.msra.mxu0 %v89
    %117 = vmatpush.msra.mxu0 %v87
    %118 = vmatpush.msra.mxu0 %v85
    %119 = vmatpush.msra.mxu0 %v83
    %120 = vmatpush.msra.mxu0 %v81
    %121 = vmatpush.msra.mxu0 %v79
    %122 = vmatpush.msra.mxu0 %v77
    %123 = vmatpush.msra.mxu0 %v75
    %124 = vmatpush.msra.mxu0 %v73
    %125 = vmatpush.msra.mxu0 %v71
    %126 = vmatpush.msra.mxu0 %v69
    %127 = vmatpush.msra.mxu0 %v67
    %128 = vmatpush.msra.mxu0 %v65
    %129 = vmatpush.msra.mxu0 %v63
    %130 = vmatpush.msra.mxu0 %v61
    %131 = vmatpush.msra.mxu0 %v59
    %132 = vmatmul.f32.gmra.mxu0 %v57
    %v133 = vpop.f32.mrf.mxu0
    %v134 = vadd.f32 %v93, %v133
    %135 = vdwg.mxu0
    %136 = vst [vmem:[%s3] sm:$0xff] %v114
    %137 = vst [vmem:[%s3 + $0x8] sm:$0xff] %v134
    // Predicated region
    $region26: #{_forward_impl.1} parent=1 // pred_check
      _
    $region27: #{_forward_impl.1} parent=1 // pred_check_branch
      %139 = sbr.rel (0) target = $region29
    $region28: #{_forward_impl.1} parent=1 // pred_region
      _
    $region29: #{_forward_impl.1} parent=1 // pred_fallthru
      _
    // Predicated region
    $region30: #{_forward_impl.1} parent=1 // pred_check
      _
    $region31: #{_forward_impl.1} parent=1 // pred_check_branch
      %141 = sbr.rel (0) target = $region33
    $region32: #{_forward_impl.1} parent=1 // pred_region
      _
    $region33: #{_forward_impl.1} parent=1 // pred_fallthru
      _
    %142 = vsyncpa [#allocation3], 1
    %143 = vsyncpa [#allocation5], 1

</llo_original>
